<compile_context>
chip_gen: v7x
topology: tpu7x:2x2x1
jax: 0.10.0
libtpu: 0.0.40
codegen_flags: <defaults>
</compile_context>

<pallas_src>
import jax
import jax.numpy as jnp
from jax.experimental import pallas as pl
from jax.experimental.pallas import tpu as pltpu

BN_EPS = 0.001  # matches torch.nn.BatchNorm1d(eps=0.001)


def _round_up(x, m):
    return (x + m - 1) // m * m


def _make_linear_stats_kernel(num_k):
    """Phase 1: zc = x @ W (pre-bias), z = zc + b, plus per-row-tile per-channel
    (sum, sum_of_squares) of zc for BatchNorm.  Padded rows of x are zero, so they
    contribute exactly 0 to the statistics — no masking needed."""

    if num_k == 1:
        # Whole-K tile: no accumulator, no program_id anywhere.
        def kernel(x_ref, w_ref, b_ref, z_ref, sum_ref, sq_ref):
            zc = jnp.dot(x_ref[...], w_ref[...], preferred_element_type=jnp.float32)
            sum_ref[...] = jnp.sum(zc, axis=0, keepdims=True)[None]        # (1,1,TN)
            sq_ref[...] = jnp.sum(zc * zc, axis=0, keepdims=True)[None]    # (1,1,TN)
            z_ref[...] = (zc + b_ref[...]).astype(z_ref.dtype)

        return kernel, False  # no accumulator scratch

    def kernel(x_ref, w_ref, b_ref, z_ref, sum_ref, sq_ref, acc_ref):
        # program_id is bound ONLY at the top level (never inside pl.when bodies).
        k = pl.program_id(2)

        @pl.when(k == 0)
        def _init():
            acc_ref[...] = jnp.zeros_like(acc_ref)

        acc_ref[...] += jnp.dot(x_ref[...], w_ref[...],
                                preferred_element_type=jnp.float32)

        @pl.when(k == num_k - 1)
        def _finalize():
            zc = acc_ref[...]                                               # (TM, TN) f32
            sum_ref[...] = jnp.sum(zc, axis=0, keepdims=True)[None]
            sq_ref[...] = jnp.sum(zc * zc, axis=0, keepdims=True)[None]
            z_ref[...] = (zc + b_ref[...]).astype(z_ref.dtype)

    return kernel, True


def _norm_relu_kernel(z_ref, scale_ref, shift_ref, o_ref):
    """Phase 2: y = relu(z * scale + shift); scale/shift fold mean/var/gamma/beta."""
    y = z_ref[...].astype(jnp.float32) * scale_ref[...] + shift_ref[...]
    o_ref[...] = jnp.maximum(y, 0.0).astype(o_ref.dtype)


@jax.jit
def pos_frontend(x, weight, bias, gamma, beta):
    """x: (B, T, d_in).  weight: (d_out, d_in) (PyTorch layout).  Returns (B, T, d_out)."""
    B, T, d_in = x.shape
    d_out = weight.shape[0]
    N = B * T
    out_dtype = x.dtype
    itemsize = jnp.dtype(out_dtype).itemsize

    # ---- Tile selection -------------------------------------------------------------
    TM = min(512, _round_up(N, 8))
    TN = 512 if d_out >= 512 else (256 if d_out >= 256 else 128)
    if d_in <= 1024:
        TK = _round_up(d_in, 128)       # whole K in one tile -> no K grid axis
    else:
        TK = 512                        # K-tiled accumulation

    d_out_p = _round_up(d_out, TN)
    num_j = d_out_p // TN
    N_p = _round_up(N, TM)
    num_i = N_p // TM
    # Keep both TensorCores busy on v7x: make sure the "parallel" axes have >= 2 tiles.
    if num_i * num_j < 2 and TM >= 16:
        TM = _round_up(TM // 2, 8)
        N_p = _round_up(N, TM)
        num_i = N_p // TM
    d_in_p = _round_up(d_in, TK)
    num_k = d_in_p // TK

    # Zero padding keeps the matmul and the BN statistics exact (padded rows give zc == 0).
    # TODO(synk): padding/slicing is an extra HBM pass when dims are not tile-aligned; skipped
    # only for correctness safety of the ragged boundary blocks.
    x2d = jnp.pad(x.reshape(N, d_in), ((0, N_p - N), (0, d_in_p - d_in)))
    w_t = jnp.pad(weight.T, ((0, d_in_p - d_in), (0, d_out_p - d_out)))     # (d_in_p, d_out_p)
    b_p = jnp.pad(bias.astype(jnp.float32), (0, d_out_p - d_out)).reshape(1, d_out_p)

    kernel, needs_acc = _make_linear_stats_kernel(num_k)
    scratch = [pltpu.VMEM((TM, TN), jnp.float32)] if needs_acc else []

    # ---- Phase 1: tiled Linear + per-row-tile BN partial statistics ------------------
    z, sums, sqs = pl.pallas_call(
        kernel,
        out_shape=(
            jax.ShapeDtypeStruct((N_p, d_out_p), out_dtype),
            jax.ShapeDtypeStruct((num_i, 1, d_out_p), jnp.float32),
            jax.ShapeDtypeStruct((num_i, 1, d_out_p), jnp.float32),
        ),
        grid=(num_i, num_j, num_k),
        in_specs=[
            pl.BlockSpec((TM, TK), lambda i, j, k: (i, k)),     # x tile
            pl.BlockSpec((TK, TN), lambda i, j, k: (k, j)),     # W^T tile (pre-transposed)
            pl.BlockSpec((1, TN), lambda i, j, k: (0, j)),      # bias
        ],
        out_specs=(
            pl.BlockSpec((TM, TN), lambda i, j, k: (i, j)),         # z
            pl.BlockSpec((1, 1, TN), lambda i, j, k: (i, 0, j)),    # per-tile sum(zc)
            pl.BlockSpec((1, 1, TN), lambda i, j, k: (i, 0, j)),    # per-tile sum(zc^2)
        ),
        scratch_shapes=scratch,
        compiler_params=pltpu.CompilerParams(
            dimension_semantics=("parallel", "parallel", "arbitrary"),
            vmem_limit_bytes=32 * 1024 * 1024),
        cost_estimate=pl.CostEstimate(
            flops=2 * N_p * d_in_p * d_out_p,
            transcendentals=0,
            bytes_accessed=(N_p * d_in_p + d_in_p * d_out_p + N_p * d_out_p) * itemsize),
    )(x2d, w_t, b_p)

    # ---- Finalize BN statistics (tiny (d_out_p,) vectors; plain JAX) -----------------
    # Bias-shifted one-pass stats: mean = b + E[zc], var = E[zc^2] - E[zc]^2.
    g_p = jnp.pad(gamma.astype(jnp.float32), (0, d_out_p - d_out))
    be_p = jnp.pad(beta.astype(jnp.float32), (0, d_out_p - d_out))
    mean_c = jnp.sum(sums[:, 0, :], axis=0) / N
    var = jnp.maximum(jnp.sum(sqs[:, 0, :], axis=0) / N - mean_c * mean_c, 0.0)
    inv_std = jax.lax.rsqrt(var + BN_EPS)
    mean = mean_c + b_p[0]
    scale = (g_p * inv_std).reshape(1, d_out_p)
    shift = (be_p - mean * g_p * inv_std).reshape(1, d_out_p)
    # TODO(synk): BatchNorm1d running_mean/running_var momentum updates are a training-time
    # buffer side effect and are not reflected in the returned tensor.

    # ---- Phase 2: normalize + ReLU (mem-bound, lane-dense, in-place over z) ----------
    if TM * d_out_p * itemsize <= 2 * 1024 * 1024:
        TN2 = d_out_p            # full channel width: unmasked vst, fewer grid steps
    else:
        TN2 = TN
    num_j2 = d_out_p // TN2

    out_p = pl.pallas_call(
        _norm_relu_kernel,
        out_shape=jax.ShapeDtypeStruct((N_p, d_out_p), out_dtype),
        grid=(num_i, num_j2),
        in_specs=[
            pl.BlockSpec((TM, TN2), lambda i, j: (i, j)),
            pl.BlockSpec((1, TN2), lambda i, j: (0, j)),
            pl.BlockSpec((1, TN2), lambda i, j: (0, j)),
        ],
        out_specs=pl.BlockSpec((TM, TN2), lambda i, j: (i, j)),
        input_output_aliases={0: 0},    # overwrite z in place; no extra HBM allocation
        compiler_params=pltpu.CompilerParams(
            dimension_semantics=("parallel", "parallel")),
    )(z, scale, shift)

    return out_p[:N, :d_out].reshape(B, T, d_out)


def _reference(x, weight, bias, gamma, beta):
    """Pure-JAX reference mirroring the PyTorch forward (training-mode BN)."""
    z = jnp.einsum("btd,od->bto", x, weight) + bias            # Linear
    mean = jnp.mean(z, axis=(0, 1), keepdims=True)             # BN over (B, T) per channel
    var = jnp.mean((z - mean) ** 2, axis=(0, 1), keepdims=True)
    y = (z - mean) * jax.lax.rsqrt(var + BN_EPS) * gamma + beta
    return jnp.maximum(y, 0.0)                                  # ReLU


if __name__ == "__main__":
    # Small shapes consistent with the module's forward: (B, T, d_in) -> (B, T, d_out).
    # T=7 makes N=14 a non-multiple of 8 to exercise the padded-row path.
    B, T, d_in, d_out = 2, 7, 32, 32

    key = jax.random.PRNGKey(0)
    kx, kw, kb = jax.random.split(key, 3)

    x = jax.random.normal(kx, (B, T, d_in), dtype=jnp.float32)

    limit = (6.0 / (d_in + d_out)) ** 0.5
    weight = jax.random.uniform(kw, (d_out, d_in), minval=-limit, maxval=limit,
                                dtype=jnp.float32)
    bias = jax.random.uniform(kb, (d_out,), minval=-0.1, maxval=0.1,
                              dtype=jnp.float32)
    # BatchNorm1d default init: gamma=1, beta=0.
    gamma = jnp.ones((d_out,), dtype=jnp.float32)
    beta = jnp.zeros((d_out,), dtype=jnp.float32)

    out = jax.block_until_ready(pos_frontend(x, weight, bias, gamma, beta))
    ref = _reference(x, weight, bias, gamma, beta)

    assert out.shape == (B, T, d_out), out.shape
    assert jnp.allclose(out, ref, atol=1e-4, rtol=1e-4), \
        float(jnp.max(jnp.abs(out - ref)))

    print("KERNEL_OK")
</pallas_src>

<mosaic_0001>
module attributes {stable_mosaic.version = 11 : i64} {
  func.func @kernel(%arg0: i32, %arg1: i32, %arg2: i32, %arg3: memref<8x128xf32, #tpu.memory_space<vmem>>, %arg4: memref<128x128xf32, #tpu.memory_space<vmem>>, %arg5: memref<1x128xf32, #tpu.memory_space<vmem>>, %arg6: memref<8x128xf32, #tpu.memory_space<vmem>>, %arg7: memref<1x1x128xf32, #tpu.memory_space<vmem>>, %arg8: memref<1x1x128xf32, #tpu.memory_space<vmem>>) attributes {dimension_semantics = [#tpu.dimension_semantics<parallel>, #tpu.dimension_semantics<parallel>, #tpu.dimension_semantics<arbitrary>], iteration_bounds = array<i64: 2, 1, 1>, scalar_prefetch = 0 : i64, scratch_operands = 0 : i64, tpu.core_type = #tpu.core_type<tc>, window_params = [{transform_indices = @transform_0, window_bounds = array<i64: 8, 128>}, {transform_indices = @transform_1, window_bounds = array<i64: 128, 128>}, {transform_indices = @transform_2, window_bounds = array<i64: 1, 128>}, {transform_indices = @transform_3, window_bounds = array<i64: 8, 128>}, {transform_indices = @transform_4, window_bounds = array<i64: 1, 1, 128>}, {transform_indices = @transform_5, window_bounds = array<i64: 1, 1, 128>}]} {
    %c0 = arith.constant 0 : index
    %c0_0 = arith.constant 0 : index
    %0 = vector.load %arg3[%c0, %c0_0] : memref<8x128xf32, #tpu.memory_space<vmem>>, vector<8x128xf32>
    %c0_1 = arith.constant 0 : index
    %c0_2 = arith.constant 0 : index
    %1 = vector.load %arg4[%c0_1, %c0_2] : memref<128x128xf32, #tpu.memory_space<vmem>>, vector<128x128xf32>
    %cst = arith.constant dense<0.000000e+00> : vector<8x128xf32>
    %2 = tpu.matmul %0, %1, %cst {dimension_numbers = #tpu.dot_dimension_numbers<[1], [0], [0], [1], [0, 0, 1, 1], [], []>} : vector<8x128xf32>, vector<128x128xf32>, vector<8x128xf32> -> vector<8x128xf32>
    %cst_3 = arith.constant dense<0.000000e+00> : vector<128xf32>
    %3 = vector.multi_reduction <add>, %2, %cst_3 [0] : vector<8x128xf32> to vector<128xf32>
    %4 = vector.shape_cast %3 : vector<128xf32> to vector<1x128xf32>
    %5 = vector.shape_cast %4 : vector<1x128xf32> to vector<1x1x128xf32>
    %c0_4 = arith.constant 0 : index
    %c0_5 = arith.constant 0 : index
    %c0_6 = arith.constant 0 : index
    %6 = vector.load %arg7[%c0_4, %c0_5, %c0_6] : memref<1x1x128xf32, #tpu.memory_space<vmem>>, vector<1x1x128xf32>
    tpu.vector_store %arg7[%c0_4, %c0_5, %c0_6], %5 {strides = array<i32>} : memref<1x1x128xf32, #tpu.memory_space<vmem>>, vector<1x1x128xf32>,
    %7 = arith.mulf %2, %2 : vector<8x128xf32>
    %cst_7 = arith.constant dense<0.000000e+00> : vector<128xf32>
    %8 = vector.multi_reduction <add>, %7, %cst_7 [0] : vector<8x128xf32> to vector<128xf32>
    %9 = vector.shape_cast %8 : vector<128xf32> to vector<1x128xf32>
    %10 = vector.shape_cast %9 : vector<1x128xf32> to vector<1x1x128xf32>
    %c0_8 = arith.constant 0 : index
    %c0_9 = arith.constant 0 : index
    %c0_10 = arith.constant 0 : index
    %11 = vector.load %arg8[%c0_8, %c0_9, %c0_10] : memref<1x1x128xf32, #tpu.memory_space<vmem>>, vector<1x1x128xf32>
    tpu.vector_store %arg8[%c0_8, %c0_9, %c0_10], %10 {strides = array<i32>} : memref<1x1x128xf32, #tpu.memory_space<vmem>>, vector<1x1x128xf32>,
    %c0_11 = arith.constant 0 : index
    %c0_12 = arith.constant 0 : index
    %12 = vector.load %arg5[%c0_11, %c0_12] : memref<1x128xf32, #tpu.memory_space<vmem>>, vector<1x128xf32>
    %13 = vector.broadcast %12 : vector<1x128xf32> to vector<8x128xf32>
    %14 = arith.addf %2, %13 : vector<8x128xf32>
    %c0_13 = arith.constant 0 : index
    %c0_14 = arith.constant 0 : index
    %15 = vector.load %arg6[%c0_13, %c0_14] : memref<8x128xf32, #tpu.memory_space<vmem>>, vector<8x128xf32>
    tpu.vector_store %arg6[%c0_13, %c0_14], %14 {strides = array<i32>} : memref<8x128xf32, #tpu.memory_space<vmem>>, vector<8x128xf32>,
    return
  }
  func.func @transform_0(%arg0: i32, %arg1: i32, %arg2: i32) -> (i32, i32) {
    %c0_i32 = arith.constant 0 : i32
    return %arg0, %arg2 : i32, i32
  }
  func.func @transform_1(%arg0: i32, %arg1: i32, %arg2: i32) -> (i32, i32) {
    %c0_i32 = arith.constant 0 : i32
    return %arg2, %arg1 : i32, i32
  }
  func.func @transform_2(%arg0: i32, %arg1: i32, %arg2: i32) -> (i32, i32) {
    %c0_i32 = arith.constant 0 : i32
    %c0_i32_0 = arith.constant 0 : i32
    return %c0_i32, %arg1 : i32, i32
  }
  func.func @transform_3(%arg0: i32, %arg1: i32, %arg2: i32) -> (i32, i32) {
    %c0_i32 = arith.constant 0 : i32
    return %arg0, %arg1 : i32, i32
  }
  func.func @transform_4(%arg0: i32, %arg1: i32, %arg2: i32) -> (i32, i32, i32) {
    %c0_i32 = arith.constant 0 : i32
    %c0_i32_0 = arith.constant 0 : i32
    return %arg0, %c0_i32, %arg1 : i32, i32, i32
  }
  func.func @transform_5(%arg0: i32, %arg1: i32, %arg2: i32) -> (i32, i32, i32) {
    %c0_i32 = arith.constant 0 : i32
    %c0_i32_0 = arith.constant 0 : i32
    return %arg0, %c0_i32, %arg1 : i32, i32, i32
  }
}

module attributes {stable_mosaic.version = 11 : i64} {
  func.func @_norm_relu_kernel(%arg0: i32, %arg1: i32, %arg2: memref<8x128xf32, #tpu.memory_space<vmem>>, %arg3: memref<1x128xf32, #tpu.memory_space<vmem>>, %arg4: memref<1x128xf32, #tpu.memory_space<vmem>>, %arg5: memref<8x128xf32, #tpu.memory_space<vmem>>) attributes {dimension_semantics = [#tpu.dimension_semantics<parallel>, #tpu.dimension_semantics<parallel>], iteration_bounds = array<i64: 2, 1>, scalar_prefetch = 0 : i64, scratch_operands = 0 : i64, tpu.core_type = #tpu.core_type<tc>, window_params = [{transform_indices = @transform_0, window_bounds = array<i64: 8, 128>}, {transform_indices = @transform_1, window_bounds = array<i64: 1, 128>}, {transform_indices = @transform_2, window_bounds = array<i64: 1, 128>}, {transform_indices = @transform_3, window_bounds = array<i64: 8, 128>}]} {
    %c0 = arith.constant 0 : index
    %c0_0 = arith.constant 0 : index
    %0 = vector.load %arg2[%c0, %c0_0] : memref<8x128xf32, #tpu.memory_space<vmem>>, vector<8x128xf32>
    %c0_1 = arith.constant 0 : index
    %c0_2 = arith.constant 0 : index
    %1 = vector.load %arg3[%c0_1, %c0_2] : memref<1x128xf32, #tpu.memory_space<vmem>>, vector<1x128xf32>
    %2 = vector.broadcast %1 : vector<1x128xf32> to vector<8x128xf32>
    %3 = arith.mulf %0, %2 : vector<8x128xf32>
    %c0_3 = arith.constant 0 : index
    %c0_4 = arith.constant 0 : index
    %4 = vector.load %arg4[%c0_3, %c0_4] : memref<1x128xf32, #tpu.memory_space<vmem>>, vector<1x128xf32>
    %5 = vector.broadcast %4 : vector<1x128xf32> to vector<8x128xf32>
    %6 = arith.addf %3, %5 : vector<8x128xf32>
    %cst = arith.constant 0.000000e+00 : f32
    %7 = vector.broadcast %cst : f32 to vector<8x128xf32>
    %8 = arith.maximumf %6, %7 : vector<8x128xf32>
    %c0_5 = arith.constant 0 : index
    %c0_6 = arith.constant 0 : index
    %9 = vector.load %arg5[%c0_5, %c0_6] : memref<8x128xf32, #tpu.memory_space<vmem>>, vector<8x128xf32>
    tpu.vector_store %arg5[%c0_5, %c0_6], %8 {strides = array<i32>} : memref<8x128xf32, #tpu.memory_space<vmem>>, vector<8x128xf32>,
    return
  }
  func.func @transform_0(%arg0: i32, %arg1: i32) -> (i32, i32) {
    %c0_i32 = arith.constant 0 : i32
    return %arg0, %arg1 : i32, i32
  }
  func.func @transform_1(%arg0: i32, %arg1: i32) -> (i32, i32) {
    %c0_i32 = arith.constant 0 : i32
    %c0_i32_0 = arith.constant 0 : i32
    return %c0_i32, %arg1 : i32, i32
  }
  func.func @transform_2(%arg0: i32, %arg1: i32) -> (i32, i32) {
    %c0_i32 = arith.constant 0 : i32
    %c0_i32_0 = arith.constant 0 : i32
    return %c0_i32, %arg1 : i32, i32
  }
  func.func @transform_3(%arg0: i32, %arg1: i32) -> (i32, i32) {
    %c0_i32 = arith.constant 0 : i32
    return %arg0, %arg1 : i32, i32
  }
}

</mosaic_0001>

<llo_original>
// kernel: pos_frontend.3
$region0: #{pos_frontend.3}
  #allocation0 [shape = 'u32[]', space=smem, size = 0x4, offset = 0x4, fixed_abs, tag = 'smem constant byte address 0x4 - core index']
  #allocation1 [shape = 'u32[144,128]{1,0:T(1,128)}', space=vmem, size = 0x12000, scoped, tag = 'internal scratch']
  %s0 = inlined_call_operand.vmem [shape: f32[16,128], index: 0, kind: input, shape index: {}, may-alias: {0,3}]
  %s1 = inlined_call_operand.vmem [shape: f32[1,128], index: 1, kind: input, shape index: {}]
  %s2 = inlined_call_operand.vmem [shape: f32[1,128], index: 2, kind: input, shape index: {}]
  %s3 = inlined_call_operand.vmem [shape: f32[16,128], index: 3, kind: output, shape index: {}, may-alias: {0,3}]
  %s4 = sld [smem:[#allocation0]]
  $region45: #{pos_frontend.3} parent=0
    _
  %s6 = ssub.s32 1, %s4
  %s7 = scalar_select 0, %s6, %s4
  loop: start=0, step=1, limit=4
  $region2: #{pos_frontend.3} parent=0 // loop_pre_header
    _
  $region3: #{pos_frontend.3} parent=0 // loop_header
    %s9 = sphi 0, %s13
    %p10 = scmp.ge.s32.totalorder %s9, 4
    %s16 = sphi 0, %s28
    %s17 = sphi 0, %s24
    %s18 = sphi 0, %s16
    %s19 = sphi 0, %s17
    %s20 = sphi 0, %s18
    %s21 = sphi 0, %s19
    %s33 = sphi 0, %s35
    %s36 = sphi 0, %s33
    %s37 = sphi 0, %s36
    %s53 = sphi 0, %s37
    %s59 = sphi 0, %s61
    %s62 = sphi 0, %s59
    %s63 = sphi 0, %s62
    %s79 = sphi 0, %s63
    %s85 = sphi 0, %s87
    %s88 = sphi 0, %s85
    %s89 = sphi 0, %s88
    %s105 = sphi 0, %s89
    %s113 = sphi 0, %s115
    %s116 = sphi 0, %s113
    %s117 = sphi 0, %s116
    %s133 = sphi 0, %s117
  $region4: #{pos_frontend.3} parent=0 // loop_header_branch
    %12 = sbr.rel (%p10) target = $region8
  $region5: #{pos_frontend.3} parent=0 // loop_body
    %s14 = ssub.s32 %s9, 1
    %s15 = ssub.s32 %s9, 2
    %s22 = sadd.s32 1, %s17
    %p23 = scmp.ge.s32.totalorder %s22, 1
    %s24 = scalar_select %p23, 0, %s22
    %s25 = sadd.s32 1, %s16
    %s26 = scalar_select %p23, %s25, %s16
    %p27 = scmp.ge.s32.totalorder %s26, 2
    %s28 = scalar_select %p27, 0, %s26
    %s29 = ssub.s32 %s16, %s28
    %s30 = ssub.s32 %s17, %s24
    %s31 = sor.u32 %s29, %s30
    %p32 = scmp.eq.s32.totalorder %s31, 0
    %s34 = sadd.s32 %s33, 1
    %s35 = scalar_select %p32, %s33, %s34
    %p38 = pneg %p32
    %p39 = scmp.eq.s32.totalorder %s9, 1
    %p40 = por %p38, %p39
    %p41 = scmp.ne.s32.totalorder %s33, %s36
    %p42 = scmp.eq.s32.totalorder %s9, 0
    %p43 = por %p41, %p42
    %p44 = scmp.ne.s32.totalorder %s33, %s36
    %p45 = scmp.eq.s32.totalorder %s14, 1
    %p46 = por %p44, %p45
    %p47 = scmp.ne.s32.totalorder %s36, %s37
    %p48 = scmp.eq.s32.totalorder %s14, 0
    %p49 = por %p47, %p48
    %p50 = scmp.ne.s32.totalorder %s36, %s37
    %p51 = scmp.eq.s32.totalorder %s15, 1
    %p52 = por %p50, %p51
    %p54 = scmp.ne.s32.totalorder %s37, %s53
    %p55 = scmp.eq.s32.totalorder %s15, 0
    %p56 = por %p54, %p55
    %s57 = ssub.s32 %s17, %s24
    %p58 = scmp.eq.s32.totalorder %s57, 0
    %s60 = sadd.s32 %s59, 1
    %s61 = scalar_select %p58, %s59, %s60
    %p64 = pneg %p58
    %p65 = scmp.eq.s32.totalorder %s9, 1
    %p66 = por %p64, %p65
    %p67 = scmp.ne.s32.totalorder %s59, %s62
    %p68 = scmp.eq.s32.totalorder %s9, 0
    %p69 = por %p67, %p68
    %p70 = scmp.ne.s32.totalorder %s59, %s62
    %p71 = scmp.eq.s32.totalorder %s14, 1
    %p72 = por %p70, %p71
    %p73 = scmp.ne.s32.totalorder %s62, %s63
    %p74 = scmp.eq.s32.totalorder %s14, 0
    %p75 = por %p73, %p74
    %p76 = scmp.ne.s32.totalorder %s62, %s63
    %p77 = scmp.eq.s32.totalorder %s15, 1
    %p78 = por %p76, %p77
    %p80 = scmp.ne.s32.totalorder %s63, %s79
    %p81 = scmp.eq.s32.totalorder %s15, 0
    %p82 = por %p80, %p81
    %s83 = ssub.s32 %s17, %s24
    %p84 = scmp.eq.s32.totalorder %s83, 0
    %s86 = sadd.s32 %s85, 1
    %s87 = scalar_select %p84, %s85, %s86
    %p90 = pneg %p84
    %p91 = scmp.eq.s32.totalorder %s9, 1
    %p92 = por %p90, %p91
    %p93 = scmp.ne.s32.totalorder %s85, %s88
    %p94 = scmp.eq.s32.totalorder %s9, 0
    %p95 = por %p93, %p94
    %p96 = scmp.ne.s32.totalorder %s85, %s88
    %p97 = scmp.eq.s32.totalorder %s14, 1
    %p98 = por %p96, %p97
    %p99 = scmp.ne.s32.totalorder %s88, %s89
    %p100 = scmp.eq.s32.totalorder %s14, 0
    %p101 = por %p99, %p100
    %p102 = scmp.ne.s32.totalorder %s88, %s89
    %p103 = scmp.eq.s32.totalorder %s15, 1
    %p104 = por %p102, %p103
    %p106 = scmp.ne.s32.totalorder %s89, %s105
    %p107 = scmp.eq.s32.totalorder %s15, 0
    %p108 = por %p106, %p107
    %s109 = ssub.s32 %s16, %s28
    %s110 = ssub.s32 %s17, %s24
    %s111 = sor.u32 %s109, %s110
    %p112 = scmp.eq.s32.totalorder %s111, 0
    %s114 = sadd.s32 %s113, 1
    %s115 = scalar_select %p112, %s113, %s114
    %p118 = pneg %p112
    %p119 = scmp.eq.s32.totalorder %s9, 1
    %p120 = por %p118, %p119
    %p121 = scmp.ne.s32.totalorder %s113, %s116
    %p122 = scmp.eq.s32.totalorder %s9, 0
    %p123 = por %p121, %p122
    %p124 = scmp.ne.s32.totalorder %s113, %s116
    %p125 = scmp.eq.s32.totalorder %s14, 1
    %p126 = por %p124, %p125
    %p127 = scmp.ne.s32.totalorder %s116, %s117
    %p128 = scmp.eq.s32.totalorder %s14, 0
    %p129 = por %p127, %p128
    %p130 = scmp.ne.s32.totalorder %s116, %s117
    %p131 = scmp.eq.s32.totalorder %s15, 1
    %p132 = por %p130, %p131
    %p134 = scmp.ne.s32.totalorder %s117, %s133
    %p135 = scmp.eq.s32.totalorder %s15, 0
    %p136 = por %p134, %p135
    %p137 = scmp.le.s32.totalorder 1, %s9
    %p138 = scmp.lt.s32.totalorder %s9, 3
    %p139 = pnand %p137, %p138
    %p140 = pneg %p139
    // Predicated region
    $region9: #{pos_frontend.3} parent=5 // pred_check
      _
    $region10: #{pos_frontend.3} parent=5 // pred_check_branch
      %142 = sbr.rel (%p139) target = $region12
    $region11: #{pos_frontend.3} parent=5 // pred_region
      %s143 = ssub.s32 %s9, 1
      // Predicated region
      $region13: #{pos_frontend.3} parent=11 // pred_check
        %p144 = pneg %p75
      $region14: #{pos_frontend.3} parent=11 // pred_check_branch
        %146 = sbr.rel (%p144) target = $region16
      $region15: #{pos_frontend.3} parent=11 // pred_region
        %p147 = scmp.lt.s32.totalorder %s19, 0
        %s148 = scalar_select %p147, %s19, 0
        %s149 = scalar_lea.vmem %s1, %s148
      $region16: #{pos_frontend.3} parent=11 // pred_fallthru
        _
      // Predicated region
      $region17: #{pos_frontend.3} parent=11 // pred_check
        %p150 = pneg %p101
      $region18: #{pos_frontend.3} parent=11 // pred_check_branch
        %152 = sbr.rel (%p150) target = $region20
      $region19: #{pos_frontend.3} parent=11 // pred_region
        %p153 = scmp.lt.s32.totalorder %s19, 0
        %s154 = scalar_select %p153, %s19, 0
        %s155 = scalar_lea.vmem %s2, %s154
      $region20: #{pos_frontend.3} parent=11 // pred_fallthru
        _
    $region12: #{pos_frontend.3} parent=5 // pred_fallthru
      _
    %p156 = scmp.lt.s32.totalorder %s9, 2
    // Predicated region
    $region21: #{pos_frontend.3} parent=5 // pred_check
      %p157 = pneg %p156
    $region22: #{pos_frontend.3} parent=5 // pred_check_branch
      %159 = sbr.rel (%p157) target = $region24
    $region23: #{pos_frontend.3} parent=5 // pred_region
      // Predicated region
      $region25: #{pos_frontend.3} parent=23 // pred_check
        %p160 = pneg %p43
      $region26: #{pos_frontend.3} parent=23 // pred_check_branch
        %162 = sbr.rel (%p160) target = $region28
      $region27: #{pos_frontend.3} parent=23 // pred_region
        %p163 = scmp.lt.s32.totalorder %s16, 1
        %s164 = scalar_select %p163, %s16, 1
        %p165 = scmp.lt.s32.totalorder %s17, 0
        %s166 = scalar_select %p165, %s17, 0
        %s167 = sadd.s32 %s166, %s164
        %s168 = smul.addr %s167, 8
        %s169 = scalar_lea.vmem %s0, %s168
      $region28: #{pos_frontend.3} parent=23 // pred_fallthru
        _
    $region24: #{pos_frontend.3} parent=5 // pred_fallthru
      _
    %p170 = scmp.le.s32.totalorder 1, %s9
    %p171 = scmp.lt.s32.totalorder %s9, 3
    %p172 = pnand %p170, %p171
    %p173 = pneg %p172
    // Predicated region
    $region29: #{pos_frontend.3} parent=5 // pred_check
      _
    $region30: #{pos_frontend.3} parent=5 // pred_check_branch
      %175 = sbr.rel (%p172) target = $region32
    $region31: #{pos_frontend.3} parent=5 // pred_region
      %s176 = ssub.s32 %s9, 1
      %p177 = scmp.lt.s32.totalorder %s18, 1
      %s178 = scalar_select %p177, %s18, 1
      %p179 = scmp.lt.s32.totalorder %s19, 0
      %s180 = scalar_select %p179, %s19, 0
      %s181 = sadd.s32 %s180, %s178
      %s182 = smul.addr %s181, 8
      %s183 = scalar_lea.vmem %s0, %s182
      %p184 = pneg %p49
      %p185 = pneg %p46
      %p186 = scmp.lt.s32.totalorder %s19, 0
      %s187 = scalar_select %p186, %s19, 0
      %s188 = scalar_lea.vmem %s1, %s187
      %p189 = pneg %p75
      %p190 = pneg %p72
      %p191 = scmp.lt.s32.totalorder %s19, 0
      %s192 = scalar_select %p191, %s19, 0
      %s193 = scalar_lea.vmem %s2, %s192
      %p194 = pneg %p101
      %p195 = pneg %p98
      %p196 = pneg %p129
      %p197 = pneg %p126
      %p198 = scmp.lt.s32.totalorder %s18, 1
      %s199 = scalar_select %p198, %s18, 1
      %p200 = scmp.lt.s32.totalorder %s19, 0
      %s201 = scalar_select %p200, %s19, 0
      %s202 = sadd.s32 %s201, %s199
      %s203 = smul.addr %s202, 8
      %s204 = scalar_lea.vmem %s3, %s203
      %p205 = scmp.lt.s32.totalorder %s18, 1
      %s206 = scalar_select %p205, %s18, 1
      %p207 = scmp.lt.s32.totalorder %s19, 0
      %s208 = scalar_select %p207, %s19, 0
      %s209 = sadd.s32 %s208, %s206
      %s210 = smul.addr %s209, 8
      %s211 = scalar_lea.vmem %s0, %s210
      %p212 = scmp.lt.s32.totalorder %s19, 0
      %s213 = scalar_select %p212, %s19, 0
      %s214 = scalar_lea.vmem %s1, %s213
      %p215 = scmp.lt.s32.totalorder %s19, 0
      %s216 = scalar_select %p215, %s19, 0
      %s217 = scalar_lea.vmem %s2, %s216
      %p218 = scmp.lt.s32.totalorder %s18, 1
      %s219 = scalar_select %p218, %s18, 1
      %p220 = scmp.lt.s32.totalorder %s19, 0
      %s221 = scalar_select %p220, %s19, 0
      %s222 = sadd.s32 %s221, %s219
      %s223 = smul.addr %s222, 8
      %s224 = scalar_lea.vmem %s3, %s223
      %v225 = vld [vmem:[%s211] sm:$0xff]
      %v226 = vld [vmem:[%s214] sm:$0x1]
      %v228 = vlaneseq
      %v229 = vshrl.u32 %v228, 7
      %v230 = vsub.s32 0, %v229
      %v231 = vrot.slane %v226, %v230
      %v233 = vmul.f32 %v225, %v231
      %v234 = vld [vmem:[%s217] sm:$0x1]
      %v236 = vlaneseq
      %v237 = vshrl.u32 %v236, 7
      %v238 = vsub.s32 0, %v237
      %v239 = vrot.slane %v234, %v238
      %v241 = vadd.f32 %v233, %v239
      %v242 = vmax.f32 %v241, 0.0
      %243 = vst [vmem:[%s224] sm:$0xff] %v242
      %p244 = scmp.lt.s32.totalorder %s18, 1
      %s245 = scalar_select %p244, %s18, 1
      %p246 = scmp.lt.s32.totalorder %s19, 0
      %s247 = scalar_select %p246, %s19, 0
      %s248 = sadd.s32 %s247, %s245
      %s249 = smul.addr %s248, 8
      %s250 = scalar_lea.vmem %s3, %s249
      // Predicated region
      $region33: #{pos_frontend.3} parent=31 // pred_check
        %p251 = pneg %p126
      $region34: #{pos_frontend.3} parent=31 // pred_check_branch
        %253 = sbr.rel (%p251) target = $region36
      $region35: #{pos_frontend.3} parent=31 // pred_region
        _
      $region36: #{pos_frontend.3} parent=31 // pred_fallthru
        _
    $region32: #{pos_frontend.3} parent=5 // pred_fallthru
      _
    %p254 = scmp.le.s32.totalorder 2, %s9
    // Predicated region
    $region37: #{pos_frontend.3} parent=5 // pred_check
      %p255 = pneg %p254
    $region38: #{pos_frontend.3} parent=5 // pred_check_branch
      %257 = sbr.rel (%p255) target = $region40
    $region39: #{pos_frontend.3} parent=5 // pred_region
      %s258 = ssub.s32 %s9, 2
      // Predicated region
      $region41: #{pos_frontend.3} parent=39 // pred_check
        %p259 = pneg %p132
      $region42: #{pos_frontend.3} parent=39 // pred_check_branch
        %261 = sbr.rel (%p259) target = $region44
      $region43: #{pos_frontend.3} parent=39 // pred_region
        %p262 = scmp.lt.s32.totalorder %s20, 1
        %s263 = scalar_select %p262, %s20, 1
        %p264 = scmp.lt.s32.totalorder %s21, 0
        %s265 = scalar_select %p264, %s21, 0
        %s266 = sadd.s32 %s265, %s263
        %s267 = smul.addr %s266, 8
        %s268 = scalar_lea.vmem %s3, %s267
      $region44: #{pos_frontend.3} parent=39 // pred_fallthru
        _
    $region40: #{pos_frontend.3} parent=5 // pred_fallthru
      _
  $region6: #{pos_frontend.3} parent=0 // loop_footer
    %s13 = sadd.s32 1, %s9
  $region7: #{pos_frontend.3} parent=0 // loop_footer_branch
    %8 = sbr.rel target = $region3
  $region8: #{pos_frontend.3} parent=0 // loop_exit
    _

// kernel: pos_frontend.2
$region0: #{pos_frontend.2}
  #allocation0 [shape = 'u32[]', space=smem, size = 0x4, offset = 0x4, fixed_abs, tag = 'smem constant byte address 0x4 - core index']
  #allocation1 [shape = 'u32[144,128]{1,0:T(1,128)}', space=vmem, size = 0x12000, scoped, tag = 'internal scratch']
  %s0 = inlined_call_operand.vmem [shape: f32[16,128], index: 0, kind: input, shape index: {}]
  %s1 = inlined_call_operand.vmem [shape: f32[128,128], index: 1, kind: input, shape index: {}]
  %s2 = inlined_call_operand.vmem [shape: f32[1,128], index: 2, kind: input, shape index: {}]
  %s3 = inlined_call_operand.vmem [shape: f32[16,128], index: 3, kind: output, shape index: {0}]
  %s4 = inlined_call_operand.vmem [shape: f32[2,1,128], index: 4, kind: output, shape index: {1}]
  %s5 = inlined_call_operand.vmem [shape: f32[2,1,128], index: 5, kind: output, shape index: {2}]
  %6 = xla_tuple %s3, %s4, %s5
  %s7 = sld [smem:[#allocation0]]
  $region61: #{pos_frontend.2} parent=0
    _
  %s9 = ssub.s32 1, %s7
  %s10 = scalar_select 0, %s9, %s7
  loop: start=0, step=1, limit=4
  $region2: #{pos_frontend.2} parent=0 // loop_pre_header
    _
  $region3: #{pos_frontend.2} parent=0 // loop_header
    %s12 = sphi 0, %s16
    %p13 = scmp.ge.s32.totalorder %s12, 4
    %s19 = sphi 0, %s38
    %s20 = sphi 0, %s34
    %s21 = sphi 0, %s30
    %s22 = sphi 0, %s19
    %s23 = sphi 0, %s20
    %s24 = sphi 0, %s21
    %s25 = sphi 0, %s22
    %s26 = sphi 0, %s23
    %s27 = sphi 0, %s24
    %s43 = sphi 0, %s45
    %s46 = sphi 0, %s43
    %s47 = sphi 0, %s46
    %s63 = sphi 0, %s47
    %s71 = sphi 0, %s73
    %s74 = sphi 0, %s71
    %s75 = sphi 0, %s74
    %s91 = sphi 0, %s75
    %s97 = sphi 0, %s99
    %s100 = sphi 0, %s97
    %s101 = sphi 0, %s100
    %s117 = sphi 0, %s101
    %s125 = sphi 0, %s127
    %s128 = sphi 0, %s125
    %s129 = sphi 0, %s128
    %s145 = sphi 0, %s129
    %s153 = sphi 0, %s155
    %s156 = sphi 0, %s153
    %s157 = sphi 0, %s156
    %s173 = sphi 0, %s157
    %s181 = sphi 0, %s183
    %s184 = sphi 0, %s181
    %s185 = sphi 0, %s184
    %s201 = sphi 0, %s185
  $region4: #{pos_frontend.2} parent=0 // loop_header_branch
    %15 = sbr.rel (%p13) target = $region8
  $region5: #{pos_frontend.2} parent=0 // loop_body
    %s17 = ssub.s32 %s12, 1
    %s18 = ssub.s32 %s12, 2
    %s28 = sadd.s32 1, %s21
    %p29 = scmp.ge.s32.totalorder %s28, 1
    %s30 = scalar_select %p29, 0, %s28
    %s31 = sadd.s32 1, %s20
    %s32 = scalar_select %p29, %s31, %s20
    %p33 = scmp.ge.s32.totalorder %s32, 1
    %s34 = scalar_select %p33, 0, %s32
    %s35 = sadd.s32 1, %s19
    %s36 = scalar_select %p33, %s35, %s19
    %p37 = scmp.ge.s32.totalorder %s36, 2
    %s38 = scalar_select %p37, 0, %s36
    %s39 = ssub.s32 %s19, %s38
    %s40 = ssub.s32 %s21, %s30
    %s41 = sor.u32 %s39, %s40
    %p42 = scmp.eq.s32.totalorder %s41, 0
    %s44 = sadd.s32 %s43, 1
    %s45 = scalar_select %p42, %s43, %s44
    %p48 = pneg %p42
    %p49 = scmp.eq.s32.totalorder %s12, 1
    %p50 = por %p48, %p49
    %p51 = scmp.ne.s32.totalorder %s43, %s46
    %p52 = scmp.eq.s32.totalorder %s12, 0
    %p53 = por %p51, %p52
    %p54 = scmp.ne.s32.totalorder %s43, %s46
    %p55 = scmp.eq.s32.totalorder %s17, 1
    %p56 = por %p54, %p55
    %p57 = scmp.ne.s32.totalorder %s46, %s47
    %p58 = scmp.eq.s32.totalorder %s17, 0
    %p59 = por %p57, %p58
    %p60 = scmp.ne.s32.totalorder %s46, %s47
    %p61 = scmp.eq.s32.totalorder %s18, 1
    %p62 = por %p60, %p61
    %p64 = scmp.ne.s32.totalorder %s47, %s63
    %p65 = scmp.eq.s32.totalorder %s18, 0
    %p66 = por %p64, %p65
    %s67 = ssub.s32 %s21, %s30
    %s68 = ssub.s32 %s20, %s34
    %s69 = sor.u32 %s67, %s68
    %p70 = scmp.eq.s32.totalorder %s69, 0
    %s72 = sadd.s32 %s71, 1
    %s73 = scalar_select %p70, %s71, %s72
    %p76 = pneg %p70
    %p77 = scmp.eq.s32.totalorder %s12, 1
    %p78 = por %p76, %p77
    %p79 = scmp.ne.s32.totalorder %s71, %s74
    %p80 = scmp.eq.s32.totalorder %s12, 0
    %p81 = por %p79, %p80
    %p82 = scmp.ne.s32.totalorder %s71, %s74
    %p83 = scmp.eq.s32.totalorder %s17, 1
    %p84 = por %p82, %p83
    %p85 = scmp.ne.s32.totalorder %s74, %s75
    %p86 = scmp.eq.s32.totalorder %s17, 0
    %p87 = por %p85, %p86
    %p88 = scmp.ne.s32.totalorder %s74, %s75
    %p89 = scmp.eq.s32.totalorder %s18, 1
    %p90 = por %p88, %p89
    %p92 = scmp.ne.s32.totalorder %s75, %s91
    %p93 = scmp.eq.s32.totalorder %s18, 0
    %p94 = por %p92, %p93
    %s95 = ssub.s32 %s20, %s34
    %p96 = scmp.eq.s32.totalorder %s95, 0
    %s98 = sadd.s32 %s97, 1
    %s99 = scalar_select %p96, %s97, %s98
    %p102 = pneg %p96
    %p103 = scmp.eq.s32.totalorder %s12, 1
    %p104 = por %p102, %p103
    %p105 = scmp.ne.s32.totalorder %s97, %s100
    %p106 = scmp.eq.s32.totalorder %s12, 0
    %p107 = por %p105, %p106
    %p108 = scmp.ne.s32.totalorder %s97, %s100
    %p109 = scmp.eq.s32.totalorder %s17, 1
    %p110 = por %p108, %p109
    %p111 = scmp.ne.s32.totalorder %s100, %s101
    %p112 = scmp.eq.s32.totalorder %s17, 0
    %p113 = por %p111, %p112
    %p114 = scmp.ne.s32.totalorder %s100, %s101
    %p115 = scmp.eq.s32.totalorder %s18, 1
    %p116 = por %p114, %p115
    %p118 = scmp.ne.s32.totalorder %s101, %s117
    %p119 = scmp.eq.s32.totalorder %s18, 0
    %p120 = por %p118, %p119
    %s121 = ssub.s32 %s19, %s38
    %s122 = ssub.s32 %s20, %s34
    %s123 = sor.u32 %s121, %s122
    %p124 = scmp.eq.s32.totalorder %s123, 0
    %s126 = sadd.s32 %s125, 1
    %s127 = scalar_select %p124, %s125, %s126
    %p130 = pneg %p124
    %p131 = scmp.eq.s32.totalorder %s12, 1
    %p132 = por %p130, %p131
    %p133 = scmp.ne.s32.totalorder %s125, %s128
    %p134 = scmp.eq.s32.totalorder %s12, 0
    %p135 = por %p133, %p134
    %p136 = scmp.ne.s32.totalorder %s125, %s128
    %p137 = scmp.eq.s32.totalorder %s17, 1
    %p138 = por %p136, %p137
    %p139 = scmp.ne.s32.totalorder %s128, %s129
    %p140 = scmp.eq.s32.totalorder %s17, 0
    %p141 = por %p139, %p140
    %p142 = scmp.ne.s32.totalorder %s128, %s129
    %p143 = scmp.eq.s32.totalorder %s18, 1
    %p144 = por %p142, %p143
    %p146 = scmp.ne.s32.totalorder %s129, %s145
    %p147 = scmp.eq.s32.totalorder %s18, 0
    %p148 = por %p146, %p147
    %s149 = ssub.s32 %s19, %s38
    %s150 = ssub.s32 %s20, %s34
    %s151 = sor.u32 %s149, %s150
    %p152 = scmp.eq.s32.totalorder %s151, 0
    %s154 = sadd.s32 %s153, 1
    %s155 = scalar_select %p152, %s153, %s154
    %p158 = pneg %p152
    %p159 = scmp.eq.s32.totalorder %s12, 1
    %p160 = por %p158, %p159
    %p161 = scmp.ne.s32.totalorder %s153, %s156
    %p162 = scmp.eq.s32.totalorder %s12, 0
    %p163 = por %p161, %p162
    %p164 = scmp.ne.s32.totalorder %s153, %s156
    %p165 = scmp.eq.s32.totalorder %s17, 1
    %p166 = por %p164, %p165
    %p167 = scmp.ne.s32.totalorder %s156, %s157
    %p168 = scmp.eq.s32.totalorder %s17, 0
    %p169 = por %p167, %p168
    %p170 = scmp.ne.s32.totalorder %s156, %s157
    %p171 = scmp.eq.s32.totalorder %s18, 1
    %p172 = por %p170, %p171
    %p174 = scmp.ne.s32.totalorder %s157, %s173
    %p175 = scmp.eq.s32.totalorder %s18, 0
    %p176 = por %p174, %p175
    %s177 = ssub.s32 %s19, %s38
    %s178 = ssub.s32 %s20, %s34
    %s179 = sor.u32 %s177, %s178
    %p180 = scmp.eq.s32.totalorder %s179, 0
    %s182 = sadd.s32 %s181, 1
    %s183 = scalar_select %p180, %s181, %s182
    %p186 = pneg %p180
    %p187 = scmp.eq.s32.totalorder %s12, 1
    %p188 = por %p186, %p187
    %p189 = scmp.ne.s32.totalorder %s181, %s184
    %p190 = scmp.eq.s32.totalorder %s12, 0
    %p191 = por %p189, %p190
    %p192 = scmp.ne.s32.totalorder %s181, %s184
    %p193 = scmp.eq.s32.totalorder %s17, 1
    %p194 = por %p192, %p193
    %p195 = scmp.ne.s32.totalorder %s184, %s185
    %p196 = scmp.eq.s32.totalorder %s17, 0
    %p197 = por %p195, %p196
    %p198 = scmp.ne.s32.totalorder %s184, %s185
    %p199 = scmp.eq.s32.totalorder %s18, 1
    %p200 = por %p198, %p199
    %p202 = scmp.ne.s32.totalorder %s185, %s201
    %p203 = scmp.eq.s32.totalorder %s18, 0
    %p204 = por %p202, %p203
    %p205 = scmp.le.s32.totalorder 1, %s12
    %p206 = scmp.lt.s32.totalorder %s12, 3
    %p207 = pnand %p205, %p206
    %p208 = pneg %p207
    // Predicated region
    $region9: #{pos_frontend.2} parent=5 // pred_check
      _
    $region10: #{pos_frontend.2} parent=5 // pred_check_branch
      %210 = sbr.rel (%p207) target = $region12
    $region11: #{pos_frontend.2} parent=5 // pred_region
      %s211 = ssub.s32 %s12, 1
      // Predicated region
      $region13: #{pos_frontend.2} parent=11 // pred_check
        %p212 = pneg %p87
      $region14: #{pos_frontend.2} parent=11 // pred_check_branch
        %214 = sbr.rel (%p212) target = $region16
      $region15: #{pos_frontend.2} parent=11 // pred_region
        %s215 = smul.u32 16, %s24
        %p216 = scmp.lt.s32.totalorder %s215, 15
        %s217 = scalar_select %p216, %s215, 15
        %p218 = scmp.lt.s32.totalorder %s23, 0
        %s219 = scalar_select %p218, %s23, 0
        %s220 = sadd.s32 %s219, %s217
        %s221 = smul.addr %s220, 8
        %s222 = scalar_lea.vmem %s1, %s221
        %s223 = smul.u32 16, %s24
      $region16: #{pos_frontend.2} parent=11 // pred_fallthru
        _
      // Predicated region
      $region17: #{pos_frontend.2} parent=11 // pred_check
        %p224 = pneg %p113
      $region18: #{pos_frontend.2} parent=11 // pred_check_branch
        %226 = sbr.rel (%p224) target = $region20
      $region19: #{pos_frontend.2} parent=11 // pred_region
        %p227 = scmp.lt.s32.totalorder %s23, 0
        %s228 = scalar_select %p227, %s23, 0
        %s229 = scalar_lea.vmem %s2, %s228
      $region20: #{pos_frontend.2} parent=11 // pred_fallthru
        _
    $region12: #{pos_frontend.2} parent=5 // pred_fallthru
      _
    %p230 = scmp.lt.s32.totalorder %s12, 2
    // Predicated region
    $region21: #{pos_frontend.2} parent=5 // pred_check
      %p231 = pneg %p230
    $region22: #{pos_frontend.2} parent=5 // pred_check_branch
      %233 = sbr.rel (%p231) target = $region24
    $region23: #{pos_frontend.2} parent=5 // pred_region
      // Predicated region
      $region25: #{pos_frontend.2} parent=23 // pred_check
        %p234 = pneg %p53
      $region26: #{pos_frontend.2} parent=23 // pred_check_branch
        %236 = sbr.rel (%p234) target = $region28
      $region27: #{pos_frontend.2} parent=23 // pred_region
        %p237 = scmp.lt.s32.totalorder %s19, 1
        %s238 = scalar_select %p237, %s19, 1
        %p239 = scmp.lt.s32.totalorder %s21, 0
        %s240 = scalar_select %p239, %s21, 0
        %s241 = sadd.s32 %s240, %s238
        %s242 = smul.addr %s241, 8
        %s243 = scalar_lea.vmem %s0, %s242
      $region28: #{pos_frontend.2} parent=23 // pred_fallthru
        _
    $region24: #{pos_frontend.2} parent=5 // pred_fallthru
      _
    %p244 = scmp.le.s32.totalorder 1, %s12
    %p245 = scmp.lt.s32.totalorder %s12, 3
    %p246 = pnand %p244, %p245
    %p247 = pneg %p246
    // Predicated region
    $region29: #{pos_frontend.2} parent=5 // pred_check
      _
    $region30: #{pos_frontend.2} parent=5 // pred_check_branch
      %249 = sbr.rel (%p246) target = $region32
    $region31: #{pos_frontend.2} parent=5 // pred_region
      %s250 = ssub.s32 %s12, 1
      %p251 = scmp.lt.s32.totalorder %s22, 1
      %s252 = scalar_select %p251, %s22, 1
      %p253 = scmp.lt.s32.totalorder %s24, 0
      %s254 = scalar_select %p253, %s24, 0
      %s255 = sadd.s32 %s254, %s252
      %s256 = smul.addr %s255, 8
      %s257 = scalar_lea.vmem %s0, %s256
      %p258 = pneg %p59
      %p259 = pneg %p56
      %s260 = smul.u32 16, %s24
      %p261 = scmp.lt.s32.totalorder %s260, 15
      %s262 = scalar_select %p261, %s260, 15
      %p263 = scmp.lt.s32.totalorder %s23, 0
      %s264 = scalar_select %p263, %s23, 0
      %s265 = sadd.s32 %s264, %s262
      %s266 = smul.addr %s265, 8
      %s267 = scalar_lea.vmem %s1, %s266
      %p268 = pneg %p87
      %p269 = pneg %p84
      %p270 = scmp.lt.s32.totalorder %s23, 0
      %s271 = scalar_select %p270, %s23, 0
      %s272 = scalar_lea.vmem %s2, %s271
      %p273 = pneg %p113
      %p274 = pneg %p110
      %p275 = pneg %p141
      %p276 = pneg %p138
      %p277 = scmp.lt.s32.totalorder %s22, 1
      %s278 = scalar_select %p277, %s22, 1
      %p279 = scmp.lt.s32.totalorder %s23, 0
      %s280 = scalar_select %p279, %s23, 0
      %s281 = sadd.s32 %s280, %s278
      %s282 = smul.addr %s281, 8
      %s283 = scalar_lea.vmem %s3, %s282
      %p284 = pneg %p169
      %p285 = pneg %p166
      %p286 = scmp.lt.s32.totalorder %s22, 1
      %s287 = scalar_select %p286, %s22, 1
      %p288 = scmp.lt.s32.totalorder %s23, 0
      %s289 = scalar_select %p288, %s23, 0
      %s290 = sadd.s32 %s289, %s287
      %s291 = scalar_lea.vmem %s4, %s290
      %p292 = pneg %p197
      %p293 = pneg %p194
      %p294 = scmp.lt.s32.totalorder %s22, 1
      %s295 = scalar_select %p294, %s22, 1
      %p296 = scmp.lt.s32.totalorder %s23, 0
      %s297 = scalar_select %p296, %s23, 0
      %s298 = sadd.s32 %s297, %s295
      %s299 = scalar_lea.vmem %s5, %s298
      %p300 = scmp.lt.s32.totalorder %s22, 1
      %s301 = scalar_select %p300, %s22, 1
      %p302 = scmp.lt.s32.totalorder %s24, 0
      %s303 = scalar_select %p302, %s24, 0
      %s304 = sadd.s32 %s303, %s301
      %s305 = smul.addr %s304, 8
      %s306 = scalar_lea.vmem %s0, %s305
      %s307 = smul.u32 16, %s24
      %p308 = scmp.lt.s32.totalorder %s307, 15
      %s309 = scalar_select %p308, %s307, 15
      %p310 = scmp.lt.s32.totalorder %s23, 0
      %s311 = scalar_select %p310, %s23, 0
      %s312 = sadd.s32 %s311, %s309
      %s313 = smul.addr %s312, 8
      %s314 = scalar_lea.vmem %s1, %s313
      %s315 = smul.u32 16, %s24
      %p316 = scmp.lt.s32.totalorder %s23, 0
      %s317 = scalar_select %p316, %s23, 0
      %s318 = scalar_lea.vmem %s2, %s317
      %p319 = scmp.lt.s32.totalorder %s22, 1
      %s320 = scalar_select %p319, %s22, 1
      %p321 = scmp.lt.s32.totalorder %s23, 0
      %s322 = scalar_select %p321, %s23, 0
      %s323 = sadd.s32 %s322, %s320
      %s324 = smul.addr %s323, 8
      %s325 = scalar_lea.vmem %s3, %s324
      %p326 = scmp.lt.s32.totalorder %s22, 1
      %s327 = scalar_select %p326, %s22, 1
      %p328 = scmp.lt.s32.totalorder %s23, 0
      %s329 = scalar_select %p328, %s23, 0
      %s330 = sadd.s32 %s329, %s327
      %s331 = scalar_lea.vmem %s4, %s330
      %p332 = scmp.lt.s32.totalorder %s22, 1
      %s333 = scalar_select %p332, %s22, 1
      %p334 = scmp.lt.s32.totalorder %s23, 0
      %s335 = scalar_select %p334, %s23, 0
      %s336 = sadd.s32 %s335, %s333
      %s337 = scalar_lea.vmem %s5, %s336
      %v338 = vld [vmem:[%s306] sm:$0xff]
      %v339 = vld [vmem:[%s314] sm:$0xff]
      %v340 = vld [vmem:[%s314 + $0x8] sm:$0xff]
      %v341 = vld [vmem:[%s314 + $0x10] sm:$0xff]
      %v342 = vld [vmem:[%s314 + $0x18] sm:$0xff]
      %v343 = vld [vmem:[%s314 + $0x20] sm:$0xff]
      %v344 = vld [vmem:[%s314 + $0x28] sm:$0xff]
      %v345 = vld [vmem:[%s314 + $0x30] sm:$0xff]
      %v346 = vld [vmem:[%s314 + $0x38] sm:$0xff]
      %v347 = vld [vmem:[%s314 + $0x40] sm:$0xff]
      %v348 = vld [vmem:[%s314 + $0x48] sm:$0xff]
      %v349 = vld [vmem:[%s314 + $0x50] sm:$0xff]
      %v350 = vld [vmem:[%s314 + $0x58] sm:$0xff]
      %v351 = vld [vmem:[%s314 + $0x60] sm:$0xff]
      %v352 = vld [vmem:[%s314 + $0x68] sm:$0xff]
      %v353 = vld [vmem:[%s314 + $0x70] sm:$0xff]
      %v354 = vld [vmem:[%s314 + $0x78] sm:$0xff]
      %355 = vmatprep.subr.mxu0 0.0
      %356 = vmatpush1.msra.mxu0 %v339
      %357 = vmatprep.subr.mxu0 0.0
      %358 = vmatpush1.msra.mxu0 %v340
      %359 = vmatprep.subr.mxu0 0.0
      %360 = vmatpush1.msra.mxu0 %v341
      %361 = vmatprep.subr.mxu0 0.0
      %362 = vmatpush1.msra.mxu0 %v342
      %363 = vmatprep.subr.mxu0 0.0
      %364 = vmatpush1.msra.mxu0 %v343
      %365 = vmatprep.subr.mxu0 0.0
      %366 = vmatpush1.msra.mxu0 %v344
      %367 = vmatprep.subr.mxu0 0.0
      %368 = vmatpush1.msra.mxu0 %v345
      %369 = vmatprep.subr.mxu0 0.0
      %370 = vmatpush1.msra.mxu0 %v346
      %371 = vmatprep.subr.mxu0 0.0
      %372 = vmatpush1.msra.mxu0 %v347
      %373 = vmatprep.subr.mxu0 0.0
      %374 = vmatpush1.msra.mxu0 %v348
      %375 = vmatprep.subr.mxu0 0.0
      %376 = vmatpush1.msra.mxu0 %v349
      %377 = vmatprep.subr.mxu0 0.0
      %378 = vmatpush1.msra.mxu0 %v350
      %379 = vmatprep.subr.mxu0 0.0
      %380 = vmatpush1.msra.mxu0 %v351
      %381 = vmatprep.subr.mxu0 0.0
      %382 = vmatpush1.msra.mxu0 %v352
      %383 = vmatprep.subr.mxu0 0.0
      %384 = vmatpush1.msra.mxu0 %v353
      %385 = vmatprep.subr.mxu0 0.0
      %386 = vmatpush1.msra.mxu0 %v354
      %387 = vmatprep.subr.mxu0 0.0
      %388 = vmatpush1.msra.mxu0 0.0
      %389 = vmatprep.subr.mxu0 0.0
      %390 = vmatpush1.msra.mxu0 0.0
      %391 = vmatprep.subr.mxu0 0.0
      %392 = vmatpush1.msra.mxu0 0.0
      %393 = vmatprep.subr.mxu0 0.0
      %394 = vmatpush1.msra.mxu0 0.0
      %395 = vmatprep.subr.mxu0 0.0
      %396 = vmatpush1.msra.mxu0 0.0
      %397 = vmatprep.subr.mxu0 0.0
      %398 = vmatpush1.msra.mxu0 0.0
      %399 = vmatprep.subr.mxu0 0.0
      %400 = vmatpush1.msra.mxu0 0.0
      %401 = vmatprep.subr.mxu0 0.0
      %402 = vmatpush1.msra.mxu0 0.0
      %403 = vmatprep.subr.mxu0 0.0
      %404 = vmatpush1.msra.mxu0 0.0
      %405 = vmatprep.subr.mxu0 0.0
      %406 = vmatpush1.msra.mxu0 0.0
      %407 = vmatprep.subr.mxu0 0.0
      %408 = vmatpush1.msra.mxu0 0.0
      %409 = vmatprep.subr.mxu0 0.0
      %410 = vmatpush1.msra.mxu0 0.0
      %411 = vmatprep.subr.mxu0 0.0
      %412 = vmatpush1.msra.mxu0 0.0
      %413 = vmatprep.subr.mxu0 0.0
      %414 = vmatpush1.msra.mxu0 0.0
      %415 = vmatprep.subr.mxu0 0.0
      %416 = vmatpush1.msra.mxu0 0.0
      %417 = vmatprep.subr.mxu0 0.0
      %418 = vmatpush1.msra.mxu0 0.0
      %419 = vmatprep.mubr.f32.mxu0 0.0
      %420 = vmatmul.mubr.f32.gmra.mrb[0].mxu0 %v338
      %v421 = vpop.f32.mrb[0].mxu0
      %v422 = vadd.f32 0.0, %v421
      %v423 = vpop.f32.mrb[0].mxu0
      %424 = vdwg.mxu0
      %v425 = vrot.slane %v422, 4
      %v426 = vadd.f32 %v422, %v425
      %v427 = vrot.slane %v426, 2
      %v428 = vadd.f32 %v426, %v427
      %v429 = vrot.slane %v428, 1
      %v430 = vadd.f32 %v428, %v429
      %431 = vst [vmem:[%s331] sm:$0x1] %v430
      %v432 = vmul.f32 %v422, %v422
      %v433 = vrot.slane %v432, 4
      %v434 = vadd.f32 %v432, %v433
      %v435 = vrot.slane %v434, 2
      %v436 = vadd.f32 %v434, %v435
      %v437 = vrot.slane %v436, 1
      %v438 = vadd.f32 %v436, %v437
      %439 = vst [vmem:[%s337] sm:$0x1] %v438
      %v440 = vld [vmem:[%s318] sm:$0x1]
      %v442 = vlaneseq
      %v443 = vshrl.u32 %v442, 7
      %v444 = vsub.s32 0, %v443
      %v445 = vrot.slane %v440, %v444
      %v447 = vadd.f32 %v422, %v445
      %448 = vst [vmem:[%s325] sm:$0xff] %v447
      %p449 = scmp.lt.s32.totalorder %s22, 1
      %s450 = scalar_select %p449, %s22, 1
      %p451 = scmp.lt.s32.totalorder %s23, 0
      %s452 = scalar_select %p451, %s23, 0
      %s453 = sadd.s32 %s452, %s450
      %s454 = smul.addr %s453, 8
      %s455 = scalar_lea.vmem %s3, %s454
      %p456 = scmp.lt.s32.totalorder %s22, 1
      %s457 = scalar_select %p456, %s22, 1
      %p458 = scmp.lt.s32.totalorder %s23, 0
      %s459 = scalar_select %p458, %s23, 0
      %s460 = sadd.s32 %s459, %s457
      %s461 = scalar_lea.vmem %s4, %s460
      %p462 = scmp.lt.s32.totalorder %s22, 1
      %s463 = scalar_select %p462, %s22, 1
      %p464 = scmp.lt.s32.totalorder %s23, 0
      %s465 = scalar_select %p464, %s23, 0
      %s466 = sadd.s32 %s465, %s463
      %s467 = scalar_lea.vmem %s5, %s466
      // Predicated region
      $region33: #{pos_frontend.2} parent=31 // pred_check
        %p468 = pneg %p138
      $region34: #{pos_frontend.2} parent=31 // pred_check_branch
        %470 = sbr.rel (%p468) target = $region36
      $region35: #{pos_frontend.2} parent=31 // pred_region
        _
      $region36: #{pos_frontend.2} parent=31 // pred_fallthru
        _
      // Predicated region
      $region37: #{pos_frontend.2} parent=31 // pred_check
        %p471 = pneg %p166
      $region38: #{pos_frontend.2} parent=31 // pred_check_branch
        %473 = sbr.rel (%p471) target = $region40
      $region39: #{pos_frontend.2} parent=31 // pred_region
        _
      $region40: #{pos_frontend.2} parent=31 // pred_fallthru
        _
      // Predicated region
      $region41: #{pos_frontend.2} parent=31 // pred_check
        %p474 = pneg %p194
      $region42: #{pos_frontend.2} parent=31 // pred_check_branch
        %476 = sbr.rel (%p474) target = $region44
      $region43: #{pos_frontend.2} parent=31 // pred_region
        _
      $region44: #{pos_frontend.2} parent=31 // pred_fallthru
        _
    $region32: #{pos_frontend.2} parent=5 // pred_fallthru
      _
    %p477 = scmp.le.s32.totalorder 2, %s12
    // Predicated region
    $region45: #{pos_frontend.2} parent=5 // pred_check
      %p478 = pneg %p477
    $region46: #{pos_frontend.2} parent=5 // pred_check_branch
      %480 = sbr.rel (%p478) target = $region48
    $region47: #{pos_frontend.2} parent=5 // pred_region
      %s481 = ssub.s32 %s12, 2
      // Predicated region
      $region49: #{pos_frontend.2} parent=47 // pred_check
        %p482 = pneg %p144
      $region50: #{pos_frontend.2} parent=47 // pred_check_branch
        %484 = sbr.rel (%p482) target = $region52
      $region51: #{pos_frontend.2} parent=47 // pred_region
        %p485 = scmp.lt.s32.totalorder %s25, 1
        %s486 = scalar_select %p485, %s25, 1
        %p487 = scmp.lt.s32.totalorder %s26, 0
        %s488 = scalar_select %p487, %s26, 0
        %s489 = sadd.s32 %s488, %s486
        %s490 = smul.addr %s489, 8
        %s491 = scalar_lea.vmem %s3, %s490
      $region52: #{pos_frontend.2} parent=47 // pred_fallthru
        _
      // Predicated region
      $region53: #{pos_frontend.2} parent=47 // pred_check
        %p492 = pneg %p172
      $region54: #{pos_frontend.2} parent=47 // pred_check_branch
        %494 = sbr.rel (%p492) target = $region56
      $region55: #{pos_frontend.2} parent=47 // pred_region
        %p495 = scmp.lt.s32.totalorder %s25, 1
        %s496 = scalar_select %p495, %s25, 1
        %p497 = scmp.lt.s32.totalorder %s26, 0
        %s498 = scalar_select %p497, %s26, 0
        %s499 = sadd.s32 %s498, %s496
        %s500 = scalar_lea.vmem %s4, %s499
      $region56: #{pos_frontend.2} parent=47 // pred_fallthru
        _
      // Predicated region
      $region57: #{pos_frontend.2} parent=47 // pred_check
        %p501 = pneg %p200
      $region58: #{pos_frontend.2} parent=47 // pred_check_branch
        %503 = sbr.rel (%p501) target = $region60
      $region59: #{pos_frontend.2} parent=47 // pred_region
        %p504 = scmp.lt.s32.totalorder %s25, 1
        %s505 = scalar_select %p504, %s25, 1
        %p506 = scmp.lt.s32.totalorder %s26, 0
        %s507 = scalar_select %p506, %s26, 0
        %s508 = sadd.s32 %s507, %s505
        %s509 = scalar_lea.vmem %s5, %s508
      $region60: #{pos_frontend.2} parent=47 // pred_fallthru
        _
    $region48: #{pos_frontend.2} parent=5 // pred_fallthru
      _
  $region6: #{pos_frontend.2} parent=0 // loop_footer
    %s16 = sadd.s32 1, %s12
  $region7: #{pos_frontend.2} parent=0 // loop_footer_branch
    %11 = sbr.rel target = $region3
  $region8: #{pos_frontend.2} parent=0 // loop_exit
    _

</llo_original>
